<compile_context>
chip_gen: v7x
topology: tpu7x:2x2x1
jax: 0.10.0
libtpu: 0.0.40
codegen_flags: <defaults>
</compile_context>

<pallas_src>
import math

import jax
import jax.numpy as jnp
from jax.experimental import pallas as pl
from jax.experimental.pallas import tpu as pltpu

MIN_VAL = 0.5
MAX_VAL = 0.75

TM_MAX = 2048  # rows-per-tile cap (multiple of 128), keeps VMEM use tiny


def _round_up(a, b):
    return (a + b - 1) // b * b


def linear_clamp_kernel(w_ref, b_ref, x_ref, o_ref):
    # w_ref: (N, K)   b_ref: (N, 1)   x_ref: (K, TM)   o_ref: (N, TM)
    # K == 3: three broadcast FMAs on the VPU (no MXU involvement).
    w = w_ref[...]                       # (N, 3)
    x0 = x_ref[0:1, :]                   # (1, TM)
    x1 = x_ref[1:2, :]
    x2 = x_ref[2:3, :]
    y = (w[:, 0:1] * x0                  # (N,1)*(1,TM) -> (N,TM)
         + w[:, 1:2] * x1
         + w[:, 2:3] * x2
         + b_ref[...])                   # (N,1) broadcast over lanes
    y = jnp.maximum(y, MIN_VAL)          # torch.clamp_min
    y = jnp.minimum(y, MAX_VAL)          # torch.clamp_max
    o_ref[...] = y.astype(o_ref.dtype)


def linear_clamp(x, weight, bias):
    """x: (..., K) float32, weight: (N, K), bias: (N,) -> (..., N)."""
    *lead, k = x.shape
    n = weight.shape[0]
    m = math.prod(lead) if lead else 1

    # Transposed, lane-dense presentation: rows of x live on the lane axis.
    x_t = x.reshape(m, k).T              # (K, M)
    tm = min(TM_MAX, _round_up(m, 128))  # tile width, multiple of 128
    m_pad = _round_up(m, tm)
    if m_pad != m:
        x_t = jnp.pad(x_t, ((0, 0), (0, m_pad - m)))
    b2 = bias.reshape(n, 1)

    grid = (m_pad // tm,)

    out_t = pl.pallas_call(
        linear_clamp_kernel,
        out_shape=jax.ShapeDtypeStruct((n, m_pad), jnp.float32),
        grid_spec=pltpu.PrefetchScalarGridSpec(
            num_scalar_prefetch=0,
            grid=grid,
            in_specs=[
                pl.BlockSpec((n, k), lambda i: (0, 0)),    # weight (resident)
                pl.BlockSpec((n, 1), lambda i: (0, 0)),    # bias   (resident)
                pl.BlockSpec((k, tm), lambda i: (0, i)),   # x tile
            ],
            out_specs=pl.BlockSpec((n, tm), lambda i: (0, i)),
        ),
        compiler_params=pltpu.CompilerParams(
            dimension_semantics=("parallel",),
            vmem_limit_bytes=32 * 1024 * 1024,
        ),
    )(weight, b2, x_t)

    out = out_t[:, :m].T                 # (M, N)
    return out.reshape(*lead, n)


if __name__ == "__main__":
    key = jax.random.PRNGKey(0)
    kx, kw, kb = jax.random.split(key, 3)

    # Small shapes consistent with the module: Linear(3, 10) acts on last dim.
    B, H, W, K, N = 2, 4, 16, 3, 10
    x = jax.random.normal(kx, (B, H, W, K), dtype=jnp.float32)

    # PyTorch-style uniform(-1/sqrt(K), 1/sqrt(K)) parameter init.
    bound = 1.0 / (K ** 0.5)
    weight = jax.random.uniform(kw, (N, K), minval=-bound, maxval=bound,
                                dtype=jnp.float32)
    bias = jax.random.uniform(kb, (N,), minval=-bound, maxval=bound,
                              dtype=jnp.float32)

    out = linear_clamp(x, weight, bias)
    out = jax.block_until_ready(out)

    # Cross-check against pure-JAX reference.
    ref = jnp.clip(x @ weight.T + bias, MIN_VAL, MAX_VAL)
    assert out.shape == (B, H, W, N)
    assert jnp.allclose(out, ref, atol=1e-5, rtol=1e-5)
    print("KERNEL_OK")
</pallas_src>

<mosaic_0001>
module attributes {stable_mosaic.version = 11 : i64} {
  func.func @linear_clamp_kernel(%arg0: i32, %arg1: memref<10x3xf32, #tpu.memory_space<vmem>>, %arg2: memref<10x1xf32, #tpu.memory_space<vmem>>, %arg3: memref<3x128xf32, #tpu.memory_space<vmem>>, %arg4: memref<10x128xf32, #tpu.memory_space<vmem>>) attributes {dimension_semantics = [#tpu.dimension_semantics<parallel>], iteration_bounds = array<i64: 1>, scalar_prefetch = 0 : i64, scratch_operands = 0 : i64, tpu.core_type = #tpu.core_type<tc>, window_params = [{pipeline_mode = #tpu.pipeline_mode<synchronous>, transform_indices = @transform_0, window_bounds = array<i64: 10, 3>}, {pipeline_mode = #tpu.pipeline_mode<synchronous>, transform_indices = @transform_1, window_bounds = array<i64: 10, 1>}, {transform_indices = @transform_2, window_bounds = array<i64: 3, 128>}, {transform_indices = @transform_3, window_bounds = array<i64: 10, 128>}]} {
    %c0 = arith.constant 0 : index
    %c0_0 = arith.constant 0 : index
    %0 = vector.load %arg1[%c0, %c0_0] : memref<10x3xf32, #tpu.memory_space<vmem>>, vector<10x3xf32>
    %c0_1 = arith.constant 0 : index
    %c0_2 = arith.constant 0 : index
    %1 = vector.load %arg3[%c0_1, %c0_2] : memref<3x128xf32, #tpu.memory_space<vmem>>, vector<1x128xf32>
    %c1 = arith.constant 1 : index
    %c0_3 = arith.constant 0 : index
    %2 = vector.load %arg3[%c1, %c0_3] : memref<3x128xf32, #tpu.memory_space<vmem>>, vector<1x128xf32>
    %c2 = arith.constant 2 : index
    %c0_4 = arith.constant 0 : index
    %3 = vector.load %arg3[%c2, %c0_4] : memref<3x128xf32, #tpu.memory_space<vmem>>, vector<1x128xf32>
    %4 = vector.extract_strided_slice %0 {offsets = [0, 0], sizes = [10, 1], strides = [1, 1]} : vector<10x3xf32> to vector<10x1xf32>
    %5 = vector.broadcast %4 : vector<10x1xf32> to vector<10x128xf32>
    %6 = vector.broadcast %1 : vector<1x128xf32> to vector<10x128xf32>
    %7 = arith.mulf %5, %6 : vector<10x128xf32>
    %8 = vector.extract_strided_slice %0 {offsets = [0, 1], sizes = [10, 1], strides = [1, 1]} : vector<10x3xf32> to vector<10x1xf32>
    %9 = vector.broadcast %8 : vector<10x1xf32> to vector<10x128xf32>
    %10 = vector.broadcast %2 : vector<1x128xf32> to vector<10x128xf32>
    %11 = arith.mulf %9, %10 : vector<10x128xf32>
    %12 = arith.addf %7, %11 : vector<10x128xf32>
    %13 = vector.extract_strided_slice %0 {offsets = [0, 2], sizes = [10, 1], strides = [1, 1]} : vector<10x3xf32> to vector<10x1xf32>
    %14 = vector.broadcast %13 : vector<10x1xf32> to vector<10x128xf32>
    %15 = vector.broadcast %3 : vector<1x128xf32> to vector<10x128xf32>
    %16 = arith.mulf %14, %15 : vector<10x128xf32>
    %17 = arith.addf %12, %16 : vector<10x128xf32>
    %c0_5 = arith.constant 0 : index
    %c0_6 = arith.constant 0 : index
    %18 = vector.load %arg2[%c0_5, %c0_6] : memref<10x1xf32, #tpu.memory_space<vmem>>, vector<10x1xf32>
    %19 = vector.broadcast %18 : vector<10x1xf32> to vector<10x128xf32>
    %20 = arith.addf %17, %19 : vector<10x128xf32>
    %cst = arith.constant 5.000000e-01 : f32
    %21 = vector.broadcast %cst : f32 to vector<10x128xf32>
    %22 = arith.maximumf %20, %21 : vector<10x128xf32>
    %cst_7 = arith.constant 7.500000e-01 : f32
    %23 = vector.broadcast %cst_7 : f32 to vector<10x128xf32>
    %24 = arith.minimumf %22, %23 : vector<10x128xf32>
    %c0_8 = arith.constant 0 : index
    %c0_9 = arith.constant 0 : index
    %25 = vector.load %arg4[%c0_8, %c0_9] : memref<10x128xf32, #tpu.memory_space<vmem>>, vector<10x128xf32>
    tpu.vector_store %arg4[%c0_8, %c0_9], %24 {strides = array<i32>} : memref<10x128xf32, #tpu.memory_space<vmem>>, vector<10x128xf32>,
    return
  }
  func.func @transform_0(%arg0: i32) -> (i32, i32) {
    %c0_i32 = arith.constant 0 : i32
    %c0_i32_0 = arith.constant 0 : i32
    %c0_i32_1 = arith.constant 0 : i32
    return %c0_i32, %c0_i32_0 : i32, i32
  }
  func.func @transform_1(%arg0: i32) -> (i32, i32) {
    %c0_i32 = arith.constant 0 : i32
    %c0_i32_0 = arith.constant 0 : i32
    %c0_i32_1 = arith.constant 0 : i32
    return %c0_i32, %c0_i32_0 : i32, i32
  }
  func.func @transform_2(%arg0: i32) -> (i32, i32) {
    %c0_i32 = arith.constant 0 : i32
    %c0_i32_0 = arith.constant 0 : i32
    return %c0_i32, %arg0 : i32, i32
  }
  func.func @transform_3(%arg0: i32) -> (i32, i32) {
    %c0_i32 = arith.constant 0 : i32
    %c0_i32_0 = arith.constant 0 : i32
    return %c0_i32, %arg0 : i32, i32
  }
}

</mosaic_0001>

<llo_original>
// kernel: tpu_custom_call.1
$region0: #{tpu_custom_call.1}
  #allocation0 [shape = 'u32[]', space=smem, size = 0x4, offset = 0x4, fixed_abs, tag = 'smem constant byte address 0x4 - core index']
  #allocation1 [shape = 'u32[144,128]{1,0:T(1,128)}', space=vmem, size = 0x12000, scoped, tag = 'internal scratch']
  %s0 = inlined_call_operand.vmem [shape: f32[10,3], index: 0, kind: input, shape index: {}]
  %s1 = inlined_call_operand.vmem [shape: f32[10,1], index: 1, kind: input, shape index: {}]
  %s2 = inlined_call_operand.vmem [shape: f32[3,128], index: 2, kind: input, shape index: {}]
  %s3 = inlined_call_operand.hbm [shape: f32[10,128], index: 3, kind: output, shape index: {}]
  %s4 = sld [smem:[#allocation0]]
  $region22: #{tpu_custom_call.1} parent=0
    _
  %s6 = ssub.s32 1, %s4
  %s7 = scalar_select 0, %s6, %s4
  $region1: #{tpu_custom_call.1} parent=0
    #allocation2 [shape = 'u8[8192]{0}', space=vmem, size = 0x2000, scoped, tag = 'output window, operand 0, single buffered']
    #allocation3 [shape = 's32[1]{0}', space=sflag, size = 0x4, scoped, tag = 'scoped memory for tpu_custom_call.1']
    %8 = vsyncpa [#allocation3], 0
    // Predicated region
    $region2: #{tpu_custom_call.1} parent=1 // pred_check
      _
    $region3: #{tpu_custom_call.1} parent=1 // pred_check_branch
      %10 = sbr.rel (0) target = $region5
    $region4: #{tpu_custom_call.1} parent=1 // pred_region
      _
    $region5: #{tpu_custom_call.1} parent=1 // pred_fallthru
      _
    // Predicated region
    $region6: #{tpu_custom_call.1} parent=1 // pred_check
      _
    $region7: #{tpu_custom_call.1} parent=1 // pred_check_branch
      %12 = sbr.rel (0) target = $region9
    $region8: #{tpu_custom_call.1} parent=1 // pred_region
      _
    $region9: #{tpu_custom_call.1} parent=1 // pred_fallthru
      _
    // Predicated region
    $region10: #{tpu_custom_call.1} parent=1 // pred_check
      _
    $region11: #{tpu_custom_call.1} parent=1 // pred_check_branch
      %14 = sbr.rel (0) target = $region13
    $region12: #{tpu_custom_call.1} parent=1 // pred_region
      _
    $region13: #{tpu_custom_call.1} parent=1 // pred_fallthru
      _
    %v15 = vld [vmem:[%s0] sm:$0xff]
    %v16 = vld [vmem:[%s0 + $0x8] sm:$0x3]
    %v17 = vld [vmem:[%s2] sm:$0x1]
    %v18 = vld [vmem:[%s2 + $0x1] sm:$0x1]
    %v19 = vld [vmem:[%s2 + $0x2] sm:$0x1]
    %21 = vset.pattern.permute.xlu0 0
    %22 = vperm.xlu0 %21, %v15
    %v23 = vpop.permute.xlu0 %22
    %26 = vset.pattern.permute.xlu0 0
    %27 = vperm.xlu0 %26, %v16
    %v28 = vpop.permute.xlu0 %27
    %v30 = vlaneseq
    %v31 = vshrl.u32 %v30, 7
    %v32 = vsub.s32 0, %v31
    %v33 = vrot.slane %v17, %v32
    %v34 = vmul.f32 %v23, %v33
    %v35 = vmul.f32 %v28, %v33
    %36 = vset.pattern.permute.xlu0 1
    %37 = vperm.xlu0 %36, %v15
    %v38 = vpop.permute.xlu0 %37
    %40 = vset.pattern.permute.xlu0 1
    %41 = vperm.xlu0 %40, %v16
    %v42 = vpop.permute.xlu0 %41
    %v44 = vlaneseq
    %v45 = vshrl.u32 %v44, 7
    %v46 = vsub.s32 0, %v45
    %v47 = vrot.slane %v18, %v46
    %v48 = vmul.f32 %v38, %v47
    %v49 = vmul.f32 %v42, %v47
    %v50 = vadd.f32 %v34, %v48
    %v51 = vadd.f32 %v35, %v49
    %52 = vset.pattern.permute.xlu0 2
    %53 = vperm.xlu0 %52, %v15
    %v54 = vpop.permute.xlu0 %53
    %56 = vset.pattern.permute.xlu0 2
    %57 = vperm.xlu0 %56, %v16
    %v58 = vpop.permute.xlu0 %57
    %v60 = vlaneseq
    %v61 = vshrl.u32 %v60, 7
    %v62 = vsub.s32 0, %v61
    %v63 = vrot.slane %v19, %v62
    %v64 = vmul.f32 %v54, %v63
    %v65 = vmul.f32 %v58, %v63
    %v66 = vadd.f32 %v50, %v64
    %v67 = vadd.f32 %v51, %v65
    %v68 = vld [vmem:[%s1] sm:$0xff]
    %v69 = vld [vmem:[%s1 + $0x8] sm:$0x3]
    %71 = vset.pattern.permute.xlu0 0
    %72 = vperm.xlu0 %71, %v68
    %v73 = vpop.permute.xlu0 %72
    %76 = vset.pattern.permute.xlu0 0
    %77 = vperm.xlu0 %76, %v69
    %v78 = vpop.permute.xlu0 %77
    %v80 = vadd.f32 %v66, %v73
    %v81 = vadd.f32 %v67, %v78
    %v82 = vmax.f32 %v80, 0.5
    %v83 = vmax.f32 %v81, 0.5
    %v84 = vmin.f32 %v82, 0.75
    %v85 = vmin.f32 %v83, 0.75
    %86 = vst [vmem:[#allocation2] sm:$0xff] %v84
    %87 = vst [vmem:[#allocation2 + $0x8] sm:$0x3] %v85
    // Predicated region
    $region14: #{tpu_custom_call.1} parent=1 // pred_check
      _
    $region15: #{tpu_custom_call.1} parent=1 // pred_check_branch
      %89 = sbr.rel (0) target = $region17
    $region16: #{tpu_custom_call.1} parent=1 // pred_region
      %s91 = ssub.s32 256, 256
      %92 = vsyncadd [#allocation3], %s91
      %s93 = sshll.u32 [#allocation2], 4
      %s94 = int_to_ptr.vmem [resolvable:$true] %s93
      %99 = dma.vmem_to_hbm [thread:$0]  %s94, 256, %s3, [#allocation3], 128, 128, 8
    $region17: #{tpu_custom_call.1} parent=1 // pred_fallthru
      _
    // Predicated region
    $region18: #{tpu_custom_call.1} parent=1 // pred_check
      _
    $region19: #{tpu_custom_call.1} parent=1 // pred_check_branch
      %101 = sbr.rel (0) target = $region21
    $region20: #{tpu_custom_call.1} parent=1 // pred_region
      %102 = dma.done [#allocation3], 256
    $region21: #{tpu_custom_call.1} parent=1 // pred_fallthru
      _
    %103 = vsyncpa [#allocation3], 1

</llo_original>
